<compile_context>
chip_gen: v5e
topology: v5e:2x2
jax: 0.10.0
libtpu: 0.0.40
codegen_flags: <defaults>
</compile_context>

<pallas_src>
import functools

import jax
import jax.numpy as jnp
from jax import lax
from jax.experimental import pallas as pl
from jax.experimental.pallas import tpu as pltpu


# ----------------------------------------------------------------------------
# Kernel 1: fused normalization + size-divisibility padding
# ----------------------------------------------------------------------------
def _normalize_pad_kernel(x_ref, scale_ref, bias_ref, o_ref, *, valid_h, valid_w):
    """x_ref: (1, C, TH, W); scale/bias: (C, 1, 1); o_ref: (1, C, TH, Wp)."""
    t = pl.program_id(1)
    th = x_ref.shape[2]
    wp = o_ref.shape[3]

    # (x - mean) / std  ==  x * (1/std) + (-mean/std): stays on the VALU slots.
    y = x_ref[...] * scale_ref[...] + bias_ref[...]

    # Zero rows beyond the true image height: covers both the row padding of
    # the output and the garbage rows of partial / clamped input blocks.
    row = t * th + lax.broadcasted_iota(jnp.int32, y.shape, 2)
    y = jnp.where(row < valid_h, y, jnp.float32(0.0))

    if valid_w < wp:
        # Full aligned zero store (also fills the width padding), then
        # overwrite the valid columns with the normalized data.
        o_ref[...] = jnp.zeros(o_ref.shape, o_ref.dtype)
        o_ref[:, :, :, 0:valid_w] = y
    else:
        o_ref[...] = y


def _pick_row_tile(C, H, Wp, target_bytes=1 << 20):
    """Rows per block: multiple of 8, <= H, ~target_bytes per output buffer."""
    assert H >= 8, "expected image height >= 8"
    bytes_per_row = C * Wp * 4
    th = max(8, (target_bytes // max(bytes_per_row, 1)) // 8 * 8)
    return int(min(th, (H // 8) * 8))


def normalize_and_pad(images, pixel_mean, pixel_std, Hp, Wp):
    """images: (B, C, H, W) -> normalized, zero-padded (B, C, Hp, Wp) f32."""
    B, C, H, W = images.shape
    x = images.astype(jnp.float32)
    pm = pixel_mean.reshape(C).astype(jnp.float32)
    ps = pixel_std.reshape(C).astype(jnp.float32)
    scale = (1.0 / ps).reshape(C, 1, 1)
    bias = (-pm / ps).reshape(C, 1, 1)

    th = _pick_row_tile(C, H, Wp)          # multiple of 8, <= H, ~1 MiB blocks
    n_row_tiles = pl.cdiv(Hp, th)          # output coverage (padded height)
    n_in_blocks = pl.cdiv(H, th)           # valid input blocks (clamp target)

    kernel = functools.partial(_normalize_pad_kernel, valid_h=H, valid_w=W)
    return pl.pallas_call(
        kernel,
        out_shape=jax.ShapeDtypeStruct((B, C, Hp, Wp), jnp.float32),
        grid_spec=pltpu.PrefetchScalarGridSpec(
            num_scalar_prefetch=0,
            grid=(B, n_row_tiles),
            in_specs=[
                # clamp the row-block index so tiles fully inside the padding
                # region never index past the input; their data is masked.
                pl.BlockSpec(
                    (1, C, th, W),
                    lambda b, t: (b, 0, jnp.minimum(t, n_in_blocks - 1), 0)),
                pl.BlockSpec((C, 1, 1), lambda b, t: (0, 0, 0)),
                pl.BlockSpec((C, 1, 1), lambda b, t: (0, 0, 0)),
            ],
            out_specs=pl.BlockSpec((1, C, th, Wp), lambda b, t: (b, 0, t, 0)),
        ),
        compiler_params=pltpu.CompilerParams(
            dimension_semantics=("parallel", "parallel")),
    )(x, scale, bias)


# ----------------------------------------------------------------------------
# Kernel 2: pad_gt_boxes -- keep first box_lengths[b] boxes per image, zero
# the rest (boxes_pad[:len(gt_boxes)] = gt_boxes in the PyTorch reference).
# Single invocation over a lane-dense (B, P*4) view; lengths as a (B, 1)
# int32 vector broadcast against the proposal-index iota.
# ----------------------------------------------------------------------------
def _pad_boxes_kernel(box_ref, len_ref, out_ref):
    # box_ref / out_ref: (B, P*4) f32; len_ref: (B, 1) int32
    prop_idx = lax.broadcasted_iota(jnp.int32, box_ref.shape, 1) // 4
    out_ref[...] = jnp.where(prop_idx < len_ref[...], box_ref[...],
                             jnp.float32(0.0))


def pad_gt_boxes_pallas(gt_boxes_stacked, box_lengths):
    """
    gt_boxes_stacked: (B, P, 4) f32; rows >= box_lengths[b] are don't-care.
    box_lengths: (B,) int32
    returns: (B, P, 4) f32 with rows >= box_lengths[b] zeroed.
    """
    B, P, _ = gt_boxes_stacked.shape
    flat = gt_boxes_stacked.reshape(B, P * 4).astype(jnp.float32)
    lens = box_lengths.reshape(B, 1).astype(jnp.int32)
    out = pl.pallas_call(
        _pad_boxes_kernel,
        out_shape=jax.ShapeDtypeStruct((B, P * 4), jnp.float32),
    )(flat, lens)
    return out.reshape(B, P, 4)


# ----------------------------------------------------------------------------
# RoIPoly.forward (inference path) -- the pieces defined in the module
# ----------------------------------------------------------------------------
def roipoly_forward(images, gt_boxes_list, *, num_proposals,
                    pixel_mean, pixel_std, size_divisibility=32):
    """
    images: (B, 3, H, W) float32 batch (CHW per image, same size)
    gt_boxes_list: list of (n_i, 4) float32 ground-truth box arrays
    """
    B, C, H, W = images.shape
    Hp = ((H + size_divisibility - 1) // size_divisibility) * size_divisibility
    Wp = ((W + size_divisibility - 1) // size_divisibility) * size_divisibility

    # --- preprocess_image: normalize + pad in ONE Pallas pass
    padded = normalize_and_pad(images, pixel_mean, pixel_std, Hp, Wp)
    images_whwh = jnp.broadcast_to(
        jnp.array([W, H, W, H], dtype=jnp.float32), (B, 4))

    # --- pad_gt_boxes: stack variable-length boxes to a fixed slab (glue),
    # rows beyond each length are don't-care (sentinel-filled to show the
    # kernel really does the masking), then length-masked zeroing in Pallas.
    box_lengths = jnp.array([min(b.shape[0], num_proposals)
                             for b in gt_boxes_list], dtype=jnp.int32)
    rows = []
    for gtb in gt_boxes_list:
        gtb = gtb[:num_proposals].astype(jnp.float32)
        fill = jnp.full((num_proposals - gtb.shape[0], 4), 1e9, jnp.float32)
        rows.append(jnp.concatenate([gtb, fill], axis=0))
    stacked = jnp.stack(rows, axis=0)                       # (B, P, 4)
    proposal_boxes = pad_gt_boxes_pallas(stacked, box_lengths)

    # TODO(synk): backbone (build_backbone / FPN) is an external module with no
    # source provided -- features are not computed here.
    # TODO(synk): DynamicHead(features, proposal_boxes) has no source provided.
    # TODO(synk): SetCriterion / HungarianMatcher / prepare_targets (training
    # losses, gt_masks handling) omitted -- no source provided.

    return {
        "images": padded,                  # normalized + padded batch
        "images_whwh": images_whwh,        # (B, 4) [w, h, w, h]
        "proposal_boxes": proposal_boxes,  # (B, num_proposals, 4)
        "box_lengths": box_lengths,        # (B,)
    }


if __name__ == "__main__":
    key = jax.random.PRNGKey(0)
    k_img, k_b0, k_b1 = jax.random.split(key, 3)

    B, C, H, W = 2, 3, 16, 16
    num_proposals = 8
    size_divisibility = 32

    images = jax.random.uniform(k_img, (B, C, H, W), jnp.float32) * 255.0
    gt_boxes_list = [
        jax.random.uniform(k_b0, (3, 4), jnp.float32) * 16.0,
        jax.random.uniform(k_b1, (5, 4), jnp.float32) * 16.0,
    ]

    pixel_mean = jnp.array([123.675, 116.28, 103.53], jnp.float32)
    pixel_std = jnp.array([58.395, 57.12, 57.375], jnp.float32)

    out = roipoly_forward(images, gt_boxes_list,
                          num_proposals=num_proposals,
                          pixel_mean=pixel_mean, pixel_std=pixel_std,
                          size_divisibility=size_divisibility)
    jax.block_until_ready(out)

    # --- reference checks (plain JAX) ---
    Hp = ((H + size_divisibility - 1) // size_divisibility) * size_divisibility
    Wp = ((W + size_divisibility - 1) // size_divisibility) * size_divisibility
    ref_norm = (images - pixel_mean.reshape(3, 1, 1)) / pixel_std.reshape(3, 1, 1)
    ref_norm = jnp.pad(ref_norm, ((0, 0), (0, 0), (0, Hp - H), (0, Wp - W)))
    assert out["images"].shape == (B, C, Hp, Wp)
    assert jnp.allclose(out["images"], ref_norm, atol=1e-4, rtol=1e-5)

    ref_boxes = jnp.zeros((B, num_proposals, 4), jnp.float32)
    for i, gtb in enumerate(gt_boxes_list):
        ref_boxes = ref_boxes.at[i, :gtb.shape[0]].set(gtb)
    assert jnp.allclose(out["proposal_boxes"], ref_boxes, atol=1e-6)

    ref_whwh = jnp.broadcast_to(jnp.array([W, H, W, H], jnp.float32), (B, 4))
    assert jnp.allclose(out["images_whwh"], ref_whwh)

    print("KERNEL_OK")
</pallas_src>

<mosaic_0001>
module attributes {stable_mosaic.version = 11 : i64} {
  func.func @_normalize_pad_kernel(%arg0: i32, %arg1: i32, %arg2: memref<1x3x16x16xf32, #tpu.memory_space<vmem>>, %arg3: memref<3x1x1xf32, #tpu.memory_space<vmem>>, %arg4: memref<3x1x1xf32, #tpu.memory_space<vmem>>, %arg5: memref<1x3x16x32xf32, #tpu.memory_space<vmem>>) attributes {dimension_semantics = [#tpu.dimension_semantics<parallel>, #tpu.dimension_semantics<parallel>], iteration_bounds = array<i64: 2, 2>, scalar_prefetch = 0 : i64, scratch_operands = 0 : i64, tpu.core_type = #tpu.core_type<tc>, window_params = [{transform_indices = @transform_0, window_bounds = array<i64: 1, 3, 16, 16>}, {pipeline_mode = #tpu.pipeline_mode<synchronous>, transform_indices = @transform_1, window_bounds = array<i64: 3, 1, 1>}, {pipeline_mode = #tpu.pipeline_mode<synchronous>, transform_indices = @transform_2, window_bounds = array<i64: 3, 1, 1>}, {transform_indices = @transform_3, window_bounds = array<i64: 1, 3, 16, 32>}]} {
    %c0 = arith.constant 0 : index
    %c0_0 = arith.constant 0 : index
    %c0_1 = arith.constant 0 : index
    %c0_2 = arith.constant 0 : index
    %0 = vector.load %arg2[%c0, %c0_0, %c0_1, %c0_2] : memref<1x3x16x16xf32, #tpu.memory_space<vmem>>, vector<1x3x16x16xf32>
    %c0_3 = arith.constant 0 : index
    %c0_4 = arith.constant 0 : index
    %c0_5 = arith.constant 0 : index
    %1 = vector.load %arg3[%c0_3, %c0_4, %c0_5] : memref<3x1x1xf32, #tpu.memory_space<vmem>>, vector<3x1x1xf32>
    %2 = vector.shape_cast %1 : vector<3x1x1xf32> to vector<1x3x1x1xf32>
    %3 = vector.broadcast %2 : vector<1x3x1x1xf32> to vector<1x3x16x16xf32>
    %4 = arith.mulf %0, %3 : vector<1x3x16x16xf32>
    %c0_6 = arith.constant 0 : index
    %c0_7 = arith.constant 0 : index
    %c0_8 = arith.constant 0 : index
    %5 = vector.load %arg4[%c0_6, %c0_7, %c0_8] : memref<3x1x1xf32, #tpu.memory_space<vmem>>, vector<3x1x1xf32>
    %6 = vector.shape_cast %5 : vector<3x1x1xf32> to vector<1x3x1x1xf32>
    %7 = vector.broadcast %6 : vector<1x3x1x1xf32> to vector<1x3x16x16xf32>
    %8 = arith.addf %4, %7 : vector<1x3x16x16xf32>
    %c16_i32 = arith.constant 16 : i32
    %9 = arith.muli %arg1, %c16_i32 : i32
    %10 = tpu.iota {dimensions = array<i32: 2>} : vector<1x3x16x16xi32>
    %11 = vector.broadcast %9 : i32 to vector<1x3x16x16xi32>
    %12 = arith.addi %11, %10 : vector<1x3x16x16xi32>
    %c16_i32_9 = arith.constant 16 : i32
    %13 = vector.broadcast %c16_i32_9 : i32 to vector<1x3x16x16xi32>
    %14 = arith.cmpi slt, %12, %13 : vector<1x3x16x16xi32>
    %cst = arith.constant 0.000000e+00 : f32
    %15 = vector.broadcast %cst : f32 to vector<1x3x16x16xf32>
    %16 = arith.select %14, %8, %15 : vector<1x3x16x16xi1>, vector<1x3x16x16xf32>
    %cst_10 = arith.constant 0.000000e+00 : f32
    %17 = vector.broadcast %cst_10 : f32 to vector<1x3x16x32xf32>
    %c0_11 = arith.constant 0 : index
    %c0_12 = arith.constant 0 : index
    %c0_13 = arith.constant 0 : index
    %c0_14 = arith.constant 0 : index
    %18 = vector.load %arg5[%c0_11, %c0_12, %c0_13, %c0_14] : memref<1x3x16x32xf32, #tpu.memory_space<vmem>>, vector<1x3x16x32xf32>
    tpu.vector_store %arg5[%c0_11, %c0_12, %c0_13, %c0_14], %17 {strides = array<i32>} : memref<1x3x16x32xf32, #tpu.memory_space<vmem>>, vector<1x3x16x32xf32>,
    %c0_15 = arith.constant 0 : index
    %c0_16 = arith.constant 0 : index
    %c0_17 = arith.constant 0 : index
    %c0_18 = arith.constant 0 : index
    %19 = vector.load %arg5[%c0_15, %c0_16, %c0_17, %c0_18] : memref<1x3x16x32xf32, #tpu.memory_space<vmem>>, vector<1x3x16x16xf32>
    tpu.vector_store %arg5[%c0_15, %c0_16, %c0_17, %c0_18], %16 {strides = array<i32>} : memref<1x3x16x32xf32, #tpu.memory_space<vmem>>, vector<1x3x16x16xf32>,
    return
  }
  func.func @transform_0(%arg0: i32, %arg1: i32) -> (i32, i32, i32, i32) {
    %c0_i32 = arith.constant 0 : i32
    %0 = arith.minsi %arg1, %c0_i32 : i32
    %c0_i32_0 = arith.constant 0 : i32
    %c0_i32_1 = arith.constant 0 : i32
    %c0_i32_2 = arith.constant 0 : i32
    return %arg0, %c0_i32_0, %0, %c0_i32_1 : i32, i32, i32, i32
  }
  func.func @transform_1(%arg0: i32, %arg1: i32) -> (i32, i32, i32) {
    %c0_i32 = arith.constant 0 : i32
    %c0_i32_0 = arith.constant 0 : i32
    %c0_i32_1 = arith.constant 0 : i32
    %c0_i32_2 = arith.constant 0 : i32
    return %c0_i32, %c0_i32_0, %c0_i32_1 : i32, i32, i32
  }
  func.func @transform_2(%arg0: i32, %arg1: i32) -> (i32, i32, i32) {
    %c0_i32 = arith.constant 0 : i32
    %c0_i32_0 = arith.constant 0 : i32
    %c0_i32_1 = arith.constant 0 : i32
    %c0_i32_2 = arith.constant 0 : i32
    return %c0_i32, %c0_i32_0, %c0_i32_1 : i32, i32, i32
  }
  func.func @transform_3(%arg0: i32, %arg1: i32) -> (i32, i32, i32, i32) {
    %c0_i32 = arith.constant 0 : i32
    %c0_i32_0 = arith.constant 0 : i32
    %c0_i32_1 = arith.constant 0 : i32
    return %arg0, %c0_i32, %arg1, %c0_i32_0 : i32, i32, i32, i32
  }
}

</mosaic_0001>

<llo_original>
// kernel: tpu_custom_call.1
$region0: #{tpu_custom_call.1}
  #allocation0 [shape = 'u32[]', space=smem, size = 0x4, offset = 0x4, fixed_abs, tag = 'smem constant byte address 0x4 - core index']
  #allocation1 [shape = 'u32[72,128]{1,0:T(1,128)}', space=vmem, size = 0x9000, scoped, tag = 'internal scratch']
  #allocation6 [shape = 's32[]', space=sflag, size = 0x4, offset = 0, fixed_abs, tag = 'sflag constant byte address 0x0 - dummy sync flag']
  %s0 = inlined_call_operand.hbm [shape: f32[2,3,16,16], index: 0, kind: input, shape index: {}]
  %s1 = inlined_call_operand.vmem [shape: f32[3,1,1], index: 1, kind: input, shape index: {}]
  %s2 = inlined_call_operand.vmem [shape: f32[3,1,1], index: 2, kind: input, shape index: {}]
  %s3 = inlined_call_operand.hbm [shape: f32[2,3,32,32], index: 3, kind: output, shape index: {}]
  %s4 = sld [smem:[#allocation0]]
  $region49: #{tpu_custom_call.1} parent=0
    _
  %s6 = ssub.s32 1, %s4
  %s7 = scalar_select 0, %s6, %s4
  $region1: #{tpu_custom_call.1} parent=0
    #allocation2 [shape = 'u8[49152]{0}', space=vmem, size = 0xc000, scoped, tag = 'input window, operand 0']
    #allocation3 [shape = 's32[2]{0}', space=sflag, size = 0x8, scoped, tag = 'scoped memory for tpu_custom_call.1']
    #allocation4 [shape = 's32[2]{0}', space=sflag, size = 0x8, scoped, tag = 'scoped memory for tpu_custom_call.1']
    #allocation5 [shape = 'u8[49152]{0}', space=vmem, size = 0xc000, scoped, tag = 'output window, operand 0']
    %8 = vsyncpa [#allocation3], 0
    %s9 = scalar_lea.sflag [#allocation3], 1
    %10 = vsyncpa %s9, 0
    %11 = vsyncpa [#allocation4], 0
    %s12 = scalar_lea.sflag [#allocation4], 1
    %13 = vsyncpa %s12, 0
    loop: start=0, step=1, limit=6
    $region2: #{tpu_custom_call.1} parent=1 // loop_pre_header
      _
    $region3: #{tpu_custom_call.1} parent=1 // loop_header
      %s15 = sphi 0, %s19
      %p16 = scmp.ge.s32.totalorder %s15, 6
      %s22 = sphi 0, %s34
      %s23 = sphi 0, %s30
      %s24 = sphi 0, %s22
      %s25 = sphi 0, %s23
      %s26 = sphi 0, %s24
      %s27 = sphi 0, %s25
      %s43 = sphi 0, %s45
      %s46 = sphi 0, %s43
      %s47 = sphi 0, %s46
      %s63 = sphi 0, %s47
      %s67 = sphi 0, %s67
      %s69 = sphi 0, %s67
      %s70 = sphi 0, %s69
      %s84 = sphi 0, %s70
      %s88 = sphi 0, %s88
      %s90 = sphi 0, %s88
      %s91 = sphi 0, %s90
      %s105 = sphi 0, %s91
      %s113 = sphi 0, %s115
      %s116 = sphi 0, %s113
      %s117 = sphi 0, %s116
      %s133 = sphi 0, %s117
    $region4: #{tpu_custom_call.1} parent=1 // loop_header_branch
      %18 = sbr.rel (%p16) target = $region8
    $region5: #{tpu_custom_call.1} parent=1 // loop_body
      %s20 = ssub.s32 %s15, 1
      %s21 = ssub.s32 %s15, 2
      %s28 = sadd.s32 1, %s23
      %p29 = scmp.ge.s32.totalorder %s28, 2
      %s30 = scalar_select %p29, 0, %s28
      %s31 = sadd.s32 1, %s22
      %s32 = scalar_select %p29, %s31, %s22
      %p33 = scmp.ge.s32.totalorder %s32, 2
      %s34 = scalar_select %p33, 0, %s32
      %p35 = scmp.lt.s32.totalorder %s23, 0
      %s36 = scalar_select %p35, %s23, 0
      %p37 = scmp.lt.s32.totalorder %s30, 0
      %s38 = scalar_select %p37, %s30, 0
      %s39 = ssub.s32 %s22, %s34
      %s40 = ssub.s32 %s36, %s38
      %s41 = sor.u32 %s39, %s40
      %p42 = scmp.eq.s32.totalorder %s41, 0
      %s44 = sadd.s32 %s43, 1
      %s45 = scalar_select %p42, %s43, %s44
      %p48 = pneg %p42
      %p49 = scmp.eq.s32.totalorder %s15, 3
      %p50 = por %p48, %p49
      %p51 = scmp.ne.s32.totalorder %s43, %s46
      %p52 = scmp.eq.s32.totalorder %s15, 0
      %p53 = por %p51, %p52
      %p54 = scmp.ne.s32.totalorder %s43, %s46
      %p55 = scmp.eq.s32.totalorder %s20, 3
      %p56 = por %p54, %p55
      %p57 = scmp.ne.s32.totalorder %s46, %s47
      %p58 = scmp.eq.s32.totalorder %s20, 0
      %p59 = por %p57, %p58
      %p60 = scmp.ne.s32.totalorder %s46, %s47
      %p61 = scmp.eq.s32.totalorder %s21, 3
      %p62 = por %p60, %p61
      %p64 = scmp.ne.s32.totalorder %s47, %s63
      %p65 = scmp.eq.s32.totalorder %s21, 0
      %p66 = por %p64, %p65
      %s68 = sadd.s32 %s67, 1
      %p71 = scmp.eq.s32.totalorder %s15, 3
      %p72 = scmp.ne.s32.totalorder %s67, %s69
      %p73 = scmp.eq.s32.totalorder %s15, 0
      %p74 = por %p72, %p73
      %p75 = scmp.ne.s32.totalorder %s67, %s69
      %p76 = scmp.eq.s32.totalorder %s20, 3
      %p77 = por %p75, %p76
      %p78 = scmp.ne.s32.totalorder %s69, %s70
      %p79 = scmp.eq.s32.totalorder %s20, 0
      %p80 = por %p78, %p79
      %p81 = scmp.ne.s32.totalorder %s69, %s70
      %p82 = scmp.eq.s32.totalorder %s21, 3
      %p83 = por %p81, %p82
      %p85 = scmp.ne.s32.totalorder %s70, %s84
      %p86 = scmp.eq.s32.totalorder %s21, 0
      %p87 = por %p85, %p86
      %s89 = sadd.s32 %s88, 1
      %p92 = scmp.eq.s32.totalorder %s15, 3
      %p93 = scmp.ne.s32.totalorder %s88, %s90
      %p94 = scmp.eq.s32.totalorder %s15, 0
      %p95 = por %p93, %p94
      %p96 = scmp.ne.s32.totalorder %s88, %s90
      %p97 = scmp.eq.s32.totalorder %s20, 3
      %p98 = por %p96, %p97
      %p99 = scmp.ne.s32.totalorder %s90, %s91
      %p100 = scmp.eq.s32.totalorder %s20, 0
      %p101 = por %p99, %p100
      %p102 = scmp.ne.s32.totalorder %s90, %s91
      %p103 = scmp.eq.s32.totalorder %s21, 3
      %p104 = por %p102, %p103
      %p106 = scmp.ne.s32.totalorder %s91, %s105
      %p107 = scmp.eq.s32.totalorder %s21, 0
      %p108 = por %p106, %p107
      %s109 = ssub.s32 %s22, %s34
      %s110 = ssub.s32 %s23, %s30
      %s111 = sor.u32 %s109, %s110
      %p112 = scmp.eq.s32.totalorder %s111, 0
      %s114 = sadd.s32 %s113, 1
      %s115 = scalar_select %p112, %s113, %s114
      %p118 = pneg %p112
      %p119 = scmp.eq.s32.totalorder %s15, 3
      %p120 = por %p118, %p119
      %p121 = scmp.ne.s32.totalorder %s113, %s116
      %p122 = scmp.eq.s32.totalorder %s15, 0
      %p123 = por %p121, %p122
      %p124 = scmp.ne.s32.totalorder %s113, %s116
      %p125 = scmp.eq.s32.totalorder %s20, 3
      %p126 = por %p124, %p125
      %p127 = scmp.ne.s32.totalorder %s116, %s117
      %p128 = scmp.eq.s32.totalorder %s20, 0
      %p129 = por %p127, %p128
      %p130 = scmp.ne.s32.totalorder %s116, %s117
      %p131 = scmp.eq.s32.totalorder %s21, 3
      %p132 = por %p130, %p131
      %p134 = scmp.ne.s32.totalorder %s117, %s133
      %p135 = scmp.eq.s32.totalorder %s21, 0
      %p136 = por %p134, %p135
      %p137 = scmp.le.s32.totalorder 1, %s15
      %p138 = scmp.lt.s32.totalorder %s15, 5
      %p139 = pnand %p137, %p138
      %p140 = pneg %p139
      // Predicated region
      $region9: #{tpu_custom_call.1} parent=5 // pred_check
        _
      $region10: #{tpu_custom_call.1} parent=5 // pred_check_branch
        %142 = sbr.rel (%p139) target = $region12
      $region11: #{tpu_custom_call.1} parent=5 // pred_region
        %s143 = ssub.s32 %s15, 1
        // Predicated region
        $region13: #{tpu_custom_call.1} parent=11 // pred_check
          %p144 = pneg %p80
        $region14: #{tpu_custom_call.1} parent=11 // pred_check_branch
          %146 = sbr.rel (%p144) target = $region16
        $region15: #{tpu_custom_call.1} parent=11 // pred_region
          _
        $region16: #{tpu_custom_call.1} parent=11 // pred_fallthru
          _
        // Predicated region
        $region17: #{tpu_custom_call.1} parent=11 // pred_check
          %p147 = pneg %p101
        $region18: #{tpu_custom_call.1} parent=11 // pred_check_branch
          %149 = sbr.rel (%p147) target = $region20
        $region19: #{tpu_custom_call.1} parent=11 // pred_region
          _
        $region20: #{tpu_custom_call.1} parent=11 // pred_fallthru
          _
      $region12: #{tpu_custom_call.1} parent=5 // pred_fallthru
        _
      %p150 = scmp.lt.s32.totalorder %s15, 4
      // Predicated region
      $region21: #{tpu_custom_call.1} parent=5 // pred_check
        %p151 = pneg %p150
      $region22: #{tpu_custom_call.1} parent=5 // pred_check_branch
        %153 = sbr.rel (%p151) target = $region24
      $region23: #{tpu_custom_call.1} parent=5 // pred_region
        // Predicated region
        $region25: #{tpu_custom_call.1} parent=23 // pred_check
          %p154 = pneg %p53
        $region26: #{tpu_custom_call.1} parent=23 // pred_check_branch
          %156 = sbr.rel (%p154) target = $region28
        $region27: #{tpu_custom_call.1} parent=23 // pred_region
          %s157 = sand.u32 %s43, 1
          %s158 = scalar_lea.sflag [#allocation3], %s157
          %s159 = sand.u32 %s43, 1
          %s160 = smul.addr %s159, 48
          %s161 = scalar_lea.vmem [#allocation2], %s160
          %p162 = scmp.lt.s32.totalorder %s23, 0
          %s163 = scalar_select %p162, %s23, 0
          %s164 = smul.u32 2, %s163
          %166 = vsyncadd %s158, 0
          %s167 = smul.addr %s22, 6
          %s168 = sadd.s32 %s164, %s167
          %s169 = smul.addr %s168, 8
          %s170 = scalar_lea.hbm %s0, %s169
          %s171 = sshll.u32 %s170, 4
          %s172 = int_to_ptr.hbm [resolvable:$true] %s171
          %s173 = sshll.u32 %s161, 4
          %s174 = int_to_ptr.vmem [resolvable:$true] %s173
          %179 = dma.hbm_to_vmem [thread:$0]  %s172, 768, %s174, %s158, 128, 128, 8
        $region28: #{tpu_custom_call.1} parent=23 // pred_fallthru
          _
      $region24: #{tpu_custom_call.1} parent=5 // pred_fallthru
        _
      %p180 = scmp.le.s32.totalorder 1, %s15
      %p181 = scmp.lt.s32.totalorder %s15, 5
      %p182 = pnand %p180, %p181
      %p183 = pneg %p182
      // Predicated region
      $region29: #{tpu_custom_call.1} parent=5 // pred_check
        _
      $region30: #{tpu_custom_call.1} parent=5 // pred_check_branch
        %185 = sbr.rel (%p182) target = $region32
      $region31: #{tpu_custom_call.1} parent=5 // pred_region
        %s186 = ssub.s32 %s15, 1
        %s187 = sand.u32 %s46, 1
        %s188 = scalar_lea.sflag [#allocation3], %s187
        %s189 = sand.u32 %s46, 1
        %s190 = smul.addr %s189, 48
        %s191 = scalar_lea.vmem [#allocation2], %s190
        // Predicated region
        $region33: #{tpu_custom_call.1} parent=31 // pred_check
          %p192 = pneg %p59
        $region34: #{tpu_custom_call.1} parent=31 // pred_check_branch
          %194 = sbr.rel (%p192) target = $region36
        $region35: #{tpu_custom_call.1} parent=31 // pred_region
          %196 = dma.done %s188, 768
        $region36: #{tpu_custom_call.1} parent=31 // pred_fallthru
          _
        %s197 = sand.u32 %s46, 1
        %s198 = scalar_lea.sflag [#allocation3], %s197
        %s199 = sand.u32 %s46, 1
        %s200 = smul.addr %s199, 48
        %s201 = scalar_lea.vmem [#allocation2], %s200
        %p202 = pneg %p59
        %p203 = pneg %p56
        %p204 = pneg %p80
        %p205 = pneg %p77
        %p206 = pneg %p101
        %p207 = pneg %p98
        %p208 = pneg %p129
        %p209 = pneg %p126
        %s210 = sand.u32 %s116, 1
        %s211 = scalar_lea.sflag [#allocation4], %s210
        %s212 = sand.u32 %s116, 1
        %s213 = smul.addr %s212, 48
        %s214 = scalar_lea.vmem [#allocation5], %s213
        %p215 = scmp.lt.s32.totalorder %s25, 0
        %s216 = scalar_select %p215, %s25, 0
        %s217 = smul.u32 2, %s216
        %s218 = smul.u32 2, %s25
        %v219 = vld [vmem:[%s191] sm:$0xff]
        %v220 = vld [vmem:[%s191 + $0x8] sm:$0xff]
        %v221 = vld [vmem:[%s191 + $0x10] sm:$0xff]
        %v222 = vld [vmem:[%s191 + $0x18] sm:$0xff]
        %v223 = vld [vmem:[%s191 + $0x20] sm:$0xff]
        %v224 = vld [vmem:[%s191 + $0x28] sm:$0xff]
        %v225 = vld [vmem:[%s1] sm:$0x1]
        %v226 = vld [vmem:[%s1 + $0x1] sm:$0x1]
        %v227 = vld [vmem:[%s1 + $0x2] sm:$0x1]
        %v231 = vperm.slane %v225, 0
        %v232 = vperm.slane %v226, 0
        %v233 = vperm.slane %v227, 0
        %234 = vset.pattern.permute.xlu0 0
        %235 = vperm.xlu0 %234, %v231
        %v236 = vpop.permute.xlu0 %235
        %238 = vset.pattern.permute.xlu0 0
        %239 = vperm.xlu0 %238, %v232
        %v240 = vpop.permute.xlu0 %239
        %242 = vset.pattern.permute.xlu0 0
        %243 = vperm.xlu0 %242, %v233
        %v244 = vpop.permute.xlu0 %243
        %v246 = vmul.f32 %v219, %v236
        %v247 = vmul.f32 %v220, %v236
        %v248 = vmul.f32 %v221, %v240
        %v249 = vmul.f32 %v222, %v240
        %v250 = vmul.f32 %v223, %v244
        %v251 = vmul.f32 %v224, %v244
        %v252 = vld [vmem:[%s2] sm:$0x1]
        %v253 = vld [vmem:[%s2 + $0x1] sm:$0x1]
        %v254 = vld [vmem:[%s2 + $0x2] sm:$0x1]
        %v258 = vperm.slane %v252, 0
        %v259 = vperm.slane %v253, 0
        %v260 = vperm.slane %v254, 0
        %261 = vset.pattern.permute.xlu0 0
        %262 = vperm.xlu0 %261, %v258
        %v263 = vpop.permute.xlu0 %262
        %265 = vset.pattern.permute.xlu0 0
        %266 = vperm.xlu0 %265, %v259
        %v267 = vpop.permute.xlu0 %266
        %269 = vset.pattern.permute.xlu0 0
        %270 = vperm.xlu0 %269, %v260
        %v271 = vpop.permute.xlu0 %270
        %v273 = vadd.f32 %v246, %v263
        %v274 = vadd.f32 %v247, %v263
        %v275 = vadd.f32 %v248, %v267
        %v276 = vadd.f32 %v249, %v267
        %v277 = vadd.f32 %v250, %v271
        %v278 = vadd.f32 %v251, %v271
        %s279 = smul.u32 %s25, 16
        %v280 = vlaneseq
        %v281 = vshrl.u32 %v280, 7
        %v282 = vadd.s32 %v281, 8
        %v283 = vstv %s279
        %v284 = vadd.s32 %v283, %v281
        %v285 = vadd.s32 %v283, %v282
        %vm286 = vcmp.lt.s32.totalorder %v284, 16
        %vm287 = vcmp.lt.s32.totalorder %v285, 16
        %v288 = vsel %vm286, %v273, 0.0
        %v289 = vsel %vm287, %v274, 0.0
        %v290 = vsel %vm286, %v275, 0.0
        %v291 = vsel %vm287, %v276, 0.0
        %v292 = vsel %vm286, %v277, 0.0
        %v293 = vsel %vm287, %v278, 0.0
        %vm294 = vcmask 261120
        %295 = vst.msk [vmem:[%s214] sm:$0xff] %vm294, 0.0
        %296 = vst.msk [vmem:[%s214 + $0x8] sm:$0xff] %vm294, 0.0
        %297 = vst.msk [vmem:[%s214 + $0x10] sm:$0xff] %vm294, 0.0
        %298 = vst.msk [vmem:[%s214 + $0x18] sm:$0xff] %vm294, 0.0
        %299 = vst.msk [vmem:[%s214 + $0x20] sm:$0xff] %vm294, 0.0
        %300 = vst.msk [vmem:[%s214 + $0x28] sm:$0xff] %vm294, 0.0
        %vm301 = vcmask 130048
        %302 = vst.msk [vmem:[%s214] sm:$0xff] %vm301, %v288
        %303 = vst.msk [vmem:[%s214 + $0x8] sm:$0xff] %vm301, %v289
        %304 = vst.msk [vmem:[%s214 + $0x10] sm:$0xff] %vm301, %v290
        %305 = vst.msk [vmem:[%s214 + $0x18] sm:$0xff] %vm301, %v291
        %306 = vst.msk [vmem:[%s214 + $0x20] sm:$0xff] %vm301, %v292
        %307 = vst.msk [vmem:[%s214 + $0x28] sm:$0xff] %vm301, %v293
        %s308 = sand.u32 %s116, 1
        %s309 = scalar_lea.sflag [#allocation4], %s308
        %s310 = sand.u32 %s116, 1
        %s311 = smul.addr %s310, 48
        %s312 = scalar_lea.vmem [#allocation5], %s311
        // Predicated region
        $region37: #{tpu_custom_call.1} parent=31 // pred_check
          %p313 = pneg %p126
        $region38: #{tpu_custom_call.1} parent=31 // pred_check_branch
          %315 = sbr.rel (%p313) target = $region40
        $region39: #{tpu_custom_call.1} parent=31 // pred_region
          #allocation7 [shape = 'u32[6]{0}', space=smem, size = 0x18, scoped, tag = 'DMA stride descriptor']
          %s316 = smul.u32 2, %s25
          %318 = vsyncadd %s309, 0
          %s319 = smul.addr %s24, 12
          %s320 = sadd.s32 %s316, %s319
          %s321 = smul.addr %s320, 8
          %s322 = scalar_lea.hbm %s3, %s321
          %s324 = sshll.u32 1, 14
          %s325 = sxor.u32 4294967295, %s324
          %s328 = sshll.u32 7, 18
          %s329 = sxor.u32 4294967295, %s328
          %s330 = sand.u32 0, %s329
          %s332 = sor.u32 %s330, 0
          %s333 = sshll.u32 %s312, 4
          %s334 = int_to_ptr.vmem [resolvable:$true] %s333
          %s335 = sshll.u32 %s322, 4
          %s336 = int_to_ptr.hbm [resolvable:$true] %s335
          %342 = sst [smem:[#allocation7]] 256
          %s343 = scalar_lea.smem [#allocation7], 1
          %344 = sst [smem:[%s343]] 512
          %s345 = scalar_lea.smem [#allocation7], 2
          %346 = sst [smem:[%s345]] 2
          %s347 = scalar_lea.smem [#allocation7], 3
          %348 = sst [smem:[%s347]] 128
          %s349 = scalar_lea.smem [#allocation7], 4
          %350 = sst [smem:[%s349]] 128
          %s351 = scalar_lea.smem [#allocation7], 5
          %352 = sst [smem:[%s351]] 8
          %354 = dma.general %s334, 768, %s336, %s309, [#allocation6], [#allocation7], %s332, 0
        $region40: #{tpu_custom_call.1} parent=31 // pred_fallthru
          _
      $region32: #{tpu_custom_call.1} parent=5 // pred_fallthru
        _
      %p355 = scmp.le.s32.totalorder 2, %s15
      // Predicated region
      $region41: #{tpu_custom_call.1} parent=5 // pred_check
        %p356 = pneg %p355
      $region42: #{tpu_custom_call.1} parent=5 // pred_check_branch
        %358 = sbr.rel (%p356) target = $region44
      $region43: #{tpu_custom_call.1} parent=5 // pred_region
        %s359 = ssub.s32 %s15, 2
        // Predicated region
        $region45: #{tpu_custom_call.1} parent=43 // pred_check
          %p360 = pneg %p132
        $region46: #{tpu_custom_call.1} parent=43 // pred_check_branch
          %362 = sbr.rel (%p360) target = $region48
        $region47: #{tpu_custom_call.1} parent=43 // pred_region
          %s363 = sand.u32 %s117, 1
          %s364 = scalar_lea.sflag [#allocation4], %s363
          %s365 = sand.u32 %s117, 1
          %s366 = smul.addr %s365, 48
          %s367 = scalar_lea.vmem [#allocation5], %s366
          %369 = dma.done %s364, 768
        $region48: #{tpu_custom_call.1} parent=43 // pred_fallthru
          _
      $region44: #{tpu_custom_call.1} parent=5 // pred_fallthru
        _
    $region6: #{tpu_custom_call.1} parent=1 // loop_footer
      %s19 = sadd.s32 1, %s15
    $region7: #{tpu_custom_call.1} parent=1 // loop_footer_branch
      %14 = sbr.rel target = $region3
    $region8: #{tpu_custom_call.1} parent=1 // loop_exit
      _
    %370 = vsyncpa [#allocation3], 1
    %s371 = scalar_lea.sflag [#allocation3], 1
    %372 = vsyncpa %s371, 1
    %373 = vsyncpa [#allocation4], 1
    %s374 = scalar_lea.sflag [#allocation4], 1
    %375 = vsyncpa %s374, 1

</llo_original>
